<compile_context>
chip_gen: v5e
topology: v5e:2x2
jax: 0.10.0
libtpu: 0.0.40
codegen_flags: <defaults>
</compile_context>

<pallas_src>
import functools

import jax
import jax.numpy as jnp
from jax.experimental import pallas as pl
from jax.experimental.pallas import tpu as pltpu


def _tile_loss(alpha_ref, x_ref, y_ref, *, with_alpha):
    """Per-pixel loss for one (C, TS, 128) logits tile -> (TS, 128) f32."""
    x = x_ref[...].astype(jnp.float32)            # (C, TS, 128)
    y = y_ref[...]                                # (TS, 128) int32
    c = x.shape[0]

    # Max over the small static class axis -- unrolled, dense (TS,128) VALU ops.
    m = x[0]
    for i in range(1, c):
        m = jnp.maximum(m, x[i])

    s = None      # sum_c exp(shifted_c)
    ws = None     # sum_c exp(shifted_c) * shifted_c
    sel = None    # alpha[y] * shifted[y]        (one-hot select, unrolled)
    a_y = None    # alpha[y]
    for i in range(c):
        sh = x[i] - m
        e = jnp.exp(sh)
        s = e if s is None else s + e
        es = e * sh
        ws = es if ws is None else ws + es
        hit = (y == i)
        if with_alpha:
            a_i = alpha_ref[i]                    # SMEM scalar read
            t = jnp.where(hit, sh * a_i, 0.0)
            a = jnp.where(hit, a_i, 0.0)
            a_y = a if a_y is None else a_y + a
        else:
            t = jnp.where(hit, sh, 0.0)
        sel = t if sel is None else sel + t

    log_s = jnp.log(s)
    inv_s = pl.reciprocal(s, approx=True)         # EUP slot; ~2^-12 rel. error
    # loss = -b + CE
    #   -b = -(ws/s - log_s)
    #   CE = alpha[y]*log_s - alpha[y]*shifted[y]   (no logp tensor materialized)
    ce_scale = a_y if with_alpha else 1.0
    return -ws * inv_s + log_s + ce_scale * log_s - sel


def _loss_kernel(alpha_ref, x_ref, y_ref, loss_ref, *, with_alpha):
    loss_ref[...] = _tile_loss(
        alpha_ref, x_ref, y_ref, with_alpha=with_alpha).astype(loss_ref.dtype)


def _mean_kernel(alpha_ref, x_ref, y_ref, psum_ref, *, with_alpha, n_valid):
    # Fused-mean path: write only an (8,128) per-tile partial sum.
    loss = _tile_loss(alpha_ref, x_ref, y_ref, with_alpha=with_alpha)   # (TS,128)
    ts = loss.shape[0]
    ri = pl.program_id(1)
    row = jax.lax.broadcasted_iota(jnp.int32, loss.shape, 0)
    lane = jax.lax.broadcasted_iota(jnp.int32, loss.shape, 1)
    gidx = (ri * ts + row) * 128 + lane           # global pixel index in this batch item
    loss = jnp.where(gidx < n_valid, loss, 0.0)   # mask padded / out-of-range pixels
    if ts % 8 == 0:
        part = loss.reshape(ts // 8, 8, 128).sum(axis=0)        # VALU-only reduction
    else:
        total = jnp.sum(loss, axis=0, keepdims=True)            # (1,128)
        row8 = jax.lax.broadcasted_iota(jnp.int32, (8, 128), 0)
        part = jnp.where(row8 == 0, total, 0.0)                 # place in row 0
    psum_ref[...] = part


def _pick_ts(r, c, bsz, ts_max):
    """Rows (of 128 lanes) per grid step."""
    # Keep the logits block <= ~4 MiB so double buffering stays cheap everywhere
    # (v7x 64 MiB VMEM / 32 MiB scoped default included).
    budget = max(8, ((4 << 20) // (c * 128 * 4) // 8) * 8)
    cap = min(ts_max, budget, r)
    # v7x megacore: keep >= 2 pixel-axis steps when the batch axis alone can't
    # feed both TensorCores.
    if bsz < 2 and r >= 16:
        cap = min(cap, max(8, (r // 2 // 8) * 8))
    t = (cap // 8) * 8
    while t >= 8:
        if r % t == 0:
            return t
        t -= 8
    if r <= min(ts_max, budget):
        return r                                   # block == full dim (allowed)
    return max(8, (cap // 8) * 8)                  # ragged tail; Pallas masks OOB writes


def conditional_entropy_loss(x, y, alpha=None, reduction='mean', *, ts_max=256):
    """JAX/Pallas equivalent of ConditionalEntropyLoss.forward.

    x: (N, C, H, W) or (N, C) logits; y: (N, H, W) or (N,) int class ids.
    alpha: optional (C,) per-class weights for the cross-entropy term.
    """
    if x.ndim == 4:
        n, c, h, w = x.shape
        bsz, p = n, h * w
        xf = x.reshape(n, c, p)                    # zero-copy (contiguous H*W)
        yf = y.reshape(n, p).astype(jnp.int32)
        out_final_shape = (n, h, w)
    elif x.ndim == 2:
        n, c = x.shape
        bsz, p = 1, n
        # Classifier head: classes -> sublanes, samples -> lanes (small transpose).
        xf = x.T.reshape(1, c, n)
        yf = y.reshape(1, n).astype(jnp.int32)
        out_final_shape = (n,)
    else:
        raise ValueError(f"unsupported logits rank {x.ndim}")

    with_alpha = alpha is not None
    alpha_arr = (jnp.asarray(alpha, jnp.float32).reshape(c) if with_alpha
                 else jnp.ones((c,), jnp.float32))     # unused inside kernel

    # Lane padding only for ragged pixel counts (rare); common case is zero-copy.
    p_pad = pl.cdiv(p, 128) * 128
    if p_pad != p:
        xf = jnp.pad(xf, ((0, 0), (0, 0), (0, p_pad - p)))
        yf = jnp.pad(yf, ((0, 0), (0, p_pad - p)))
    r = p_pad // 128
    xf = xf.reshape(bsz, c, r, 128)                # classes on a leading axis,
    yf = yf.reshape(bsz, r, 128)                   # pixels as dense (rows,128) tiles

    ts = _pick_ts(r, c, bsz, ts_max)
    num_rb = pl.cdiv(r, ts)
    grid = (bsz, num_rb)

    in_specs = [
        pl.BlockSpec(memory_space=pltpu.MemorySpace.SMEM),                # alpha (C,)
        pl.BlockSpec((None, c, ts, 128), lambda bi, ri: (bi, 0, ri, 0)),  # logits tile
        pl.BlockSpec((None, ts, 128), lambda bi, ri: (bi, ri, 0)),        # target tile
    ]
    cparams = pltpu.CompilerParams(
        dimension_semantics=("parallel", "parallel"))

    if reduction == 'mean':
        psums = pl.pallas_call(
            functools.partial(_mean_kernel, with_alpha=with_alpha, n_valid=p),
            out_shape=jax.ShapeDtypeStruct((bsz, num_rb, 8, 128), jnp.float32),
            grid=grid,
            in_specs=in_specs,
            out_specs=pl.BlockSpec((None, None, 8, 128),
                                   lambda bi, ri: (bi, ri, 0, 0)),
            compiler_params=cparams,
        )(alpha_arr, xf, yf)
        return jnp.sum(psums) / jnp.float32(bsz * p)

    loss = pl.pallas_call(
        functools.partial(_loss_kernel, with_alpha=with_alpha),
        out_shape=jax.ShapeDtypeStruct((bsz, r, 128), jnp.float32),
        grid=grid,
        in_specs=in_specs,
        out_specs=pl.BlockSpec((None, ts, 128), lambda bi, ri: (bi, ri, 0)),
        compiler_params=cparams,
    )(alpha_arr, xf, yf)

    return loss.reshape(bsz, p_pad)[:, :p].reshape(out_final_shape)


def _reference(x, y, alpha, reduction):
    """Pure-JAX replica of the PyTorch forward."""
    logp = jax.nn.log_softmax(x, axis=1)
    prob = jax.nn.softmax(x, axis=1)
    b = jnp.sum(prob * logp, axis=1)
    logpt = jnp.squeeze(jnp.take_along_axis(logp, jnp.expand_dims(y, 1), axis=1), 1)
    w = alpha[y] if alpha is not None else jnp.float32(1.0)
    loss = -b + (-w * logpt)
    if reduction == 'mean':
        loss = loss.mean()
    return loss


if __name__ == "__main__":
    key = jax.random.PRNGKey(0)
    kx, ky, kx2, ky2 = jax.random.split(key, 4)

    # 4-D NCHW segmentation-style logits.
    N, C, H, W = 2, 4, 16, 16
    x = jax.random.normal(kx, (N, C, H, W), dtype=jnp.float32)
    y = jax.random.randint(ky, (N, H, W), 0, C, dtype=jnp.int32)
    alpha = jnp.array([0.5, 1.0, 1.5, 2.0], dtype=jnp.float32)

    # Tolerances account for pl.reciprocal(approx=True) (~2^-12 relative error).
    out = jax.block_until_ready(conditional_entropy_loss(x, y, alpha, reduction='none'))
    ref = _reference(x, y, alpha, 'none')
    assert out.shape == (N, H, W), out.shape
    assert jnp.allclose(out, ref, atol=1e-3, rtol=1e-3), float(jnp.max(jnp.abs(out - ref)))

    out_m = jax.block_until_ready(conditional_entropy_loss(x, y, alpha, reduction='mean'))
    ref_m = _reference(x, y, alpha, 'mean')
    assert jnp.allclose(out_m, ref_m, atol=1e-3, rtol=1e-3), (out_m, ref_m)

    # 2-D classifier-head logits, unweighted (exercises the lane-padded path).
    x2 = jax.random.normal(kx2, (8, C), dtype=jnp.float32)
    y2 = jax.random.randint(ky2, (8,), 0, C, dtype=jnp.int32)
    out2 = jax.block_until_ready(conditional_entropy_loss(x2, y2, None, reduction='none'))
    ref2 = _reference(x2, y2, None, 'none')
    assert out2.shape == (8,), out2.shape
    assert jnp.allclose(out2, ref2, atol=1e-3, rtol=1e-3), float(jnp.max(jnp.abs(out2 - ref2)))

    out2m = jax.block_until_ready(conditional_entropy_loss(x2, y2, None, reduction='mean'))
    ref2m = _reference(x2, y2, None, 'mean')
    assert jnp.allclose(out2m, ref2m, atol=1e-3, rtol=1e-3), (out2m, ref2m)

    print("KERNEL_OK")
</pallas_src>

<mosaic_0001>
module attributes {stable_mosaic.version = 11 : i64} {
  func.func @_loss_kernel(%arg0: i32, %arg1: i32, %arg2: memref<4xf32, #tpu.memory_space<smem>>, %arg3: memref<1x4x2x128xf32, #tpu.memory_space<vmem>>, %arg4: memref<1x2x128xi32, #tpu.memory_space<vmem>>, %arg5: memref<1x2x128xf32, #tpu.memory_space<vmem>>) attributes {dimension_semantics = [#tpu.dimension_semantics<parallel>, #tpu.dimension_semantics<parallel>], iteration_bounds = array<i64: 2, 1>, scalar_prefetch = 0 : i64, scratch_operands = 0 : i64, tpu.core_type = #tpu.core_type<tc>, window_params = [{transform_indices = @transform_0, window_bounds = array<i64: 4>}, {transform_indices = @transform_1, window_bounds = array<i64: 1, 4, 2, 128>}, {transform_indices = @transform_2, window_bounds = array<i64: 1, 2, 128>}, {transform_indices = @transform_3, window_bounds = array<i64: 1, 2, 128>}]} {
    %c0 = arith.constant 0 : index
    %c0_0 = arith.constant 0 : index
    %c0_1 = arith.constant 0 : index
    %c0_2 = arith.constant 0 : index
    %0 = vector.load %arg3[%c0, %c0_0, %c0_1, %c0_2] : memref<1x4x2x128xf32, #tpu.memory_space<vmem>>, vector<1x4x2x128xf32>
    %1 = vector.shape_cast %0 : vector<1x4x2x128xf32> to vector<4x2x128xf32>
    %c0_3 = arith.constant 0 : index
    %c0_4 = arith.constant 0 : index
    %c0_5 = arith.constant 0 : index
    %2 = vector.load %arg4[%c0_3, %c0_4, %c0_5] : memref<1x2x128xi32, #tpu.memory_space<vmem>>, vector<1x2x128xi32>
    %3 = vector.shape_cast %2 : vector<1x2x128xi32> to vector<2x128xi32>
    %4 = vector.extract_strided_slice %1 {offsets = [0, 0, 0], sizes = [1, 2, 128], strides = [1, 1, 1]} : vector<4x2x128xf32> to vector<1x2x128xf32>
    %5 = vector.shape_cast %4 : vector<1x2x128xf32> to vector<2x128xf32>
    %6 = vector.extract_strided_slice %1 {offsets = [1, 0, 0], sizes = [1, 2, 128], strides = [1, 1, 1]} : vector<4x2x128xf32> to vector<1x2x128xf32>
    %7 = vector.shape_cast %6 : vector<1x2x128xf32> to vector<2x128xf32>
    %8 = arith.maximumf %5, %7 : vector<2x128xf32>
    %9 = vector.extract_strided_slice %1 {offsets = [2, 0, 0], sizes = [1, 2, 128], strides = [1, 1, 1]} : vector<4x2x128xf32> to vector<1x2x128xf32>
    %10 = vector.shape_cast %9 : vector<1x2x128xf32> to vector<2x128xf32>
    %11 = arith.maximumf %8, %10 : vector<2x128xf32>
    %12 = vector.extract_strided_slice %1 {offsets = [3, 0, 0], sizes = [1, 2, 128], strides = [1, 1, 1]} : vector<4x2x128xf32> to vector<1x2x128xf32>
    %13 = vector.shape_cast %12 : vector<1x2x128xf32> to vector<2x128xf32>
    %14 = arith.maximumf %11, %13 : vector<2x128xf32>
    %15 = vector.extract_strided_slice %1 {offsets = [0, 0, 0], sizes = [1, 2, 128], strides = [1, 1, 1]} : vector<4x2x128xf32> to vector<1x2x128xf32>
    %16 = vector.shape_cast %15 : vector<1x2x128xf32> to vector<2x128xf32>
    %17 = arith.subf %16, %14 : vector<2x128xf32>
    %18 = math.exp %17 : vector<2x128xf32>
    %19 = arith.mulf %18, %17 : vector<2x128xf32>
    %c0_i32 = arith.constant 0 : i32
    %20 = vector.broadcast %c0_i32 : i32 to vector<2x128xi32>
    %21 = arith.cmpi eq, %3, %20 : vector<2x128xi32>
    %c0_6 = arith.constant 0 : index
    %22 = memref.load %arg2[%c0_6] : memref<4xf32, #tpu.memory_space<smem>>
    %23 = vector.broadcast %22 : f32 to vector<2x128xf32>
    %24 = arith.mulf %17, %23 : vector<2x128xf32>
    %cst = arith.constant 0.000000e+00 : f32
    %25 = vector.broadcast %cst : f32 to vector<2x128xf32>
    %26 = arith.select %21, %24, %25 : vector<2x128xi1>, vector<2x128xf32>
    %cst_7 = arith.constant 0.000000e+00 : f32
    %27 = vector.broadcast %22 : f32 to vector<2x128xf32>
    %28 = vector.broadcast %cst_7 : f32 to vector<2x128xf32>
    %29 = arith.select %21, %27, %28 : vector<2x128xi1>, vector<2x128xf32>
    %30 = vector.extract_strided_slice %1 {offsets = [1, 0, 0], sizes = [1, 2, 128], strides = [1, 1, 1]} : vector<4x2x128xf32> to vector<1x2x128xf32>
    %31 = vector.shape_cast %30 : vector<1x2x128xf32> to vector<2x128xf32>
    %32 = arith.subf %31, %14 : vector<2x128xf32>
    %33 = math.exp %32 : vector<2x128xf32>
    %34 = arith.addf %18, %33 : vector<2x128xf32>
    %35 = arith.mulf %33, %32 : vector<2x128xf32>
    %36 = arith.addf %19, %35 : vector<2x128xf32>
    %c1_i32 = arith.constant 1 : i32
    %37 = vector.broadcast %c1_i32 : i32 to vector<2x128xi32>
    %38 = arith.cmpi eq, %3, %37 : vector<2x128xi32>
    %c1 = arith.constant 1 : index
    %39 = memref.load %arg2[%c1] : memref<4xf32, #tpu.memory_space<smem>>
    %40 = vector.broadcast %39 : f32 to vector<2x128xf32>
    %41 = arith.mulf %32, %40 : vector<2x128xf32>
    %cst_8 = arith.constant 0.000000e+00 : f32
    %42 = vector.broadcast %cst_8 : f32 to vector<2x128xf32>
    %43 = arith.select %38, %41, %42 : vector<2x128xi1>, vector<2x128xf32>
    %cst_9 = arith.constant 0.000000e+00 : f32
    %44 = vector.broadcast %39 : f32 to vector<2x128xf32>
    %45 = vector.broadcast %cst_9 : f32 to vector<2x128xf32>
    %46 = arith.select %38, %44, %45 : vector<2x128xi1>, vector<2x128xf32>
    %47 = arith.addf %29, %46 : vector<2x128xf32>
    %48 = arith.addf %26, %43 : vector<2x128xf32>
    %49 = vector.extract_strided_slice %1 {offsets = [2, 0, 0], sizes = [1, 2, 128], strides = [1, 1, 1]} : vector<4x2x128xf32> to vector<1x2x128xf32>
    %50 = vector.shape_cast %49 : vector<1x2x128xf32> to vector<2x128xf32>
    %51 = arith.subf %50, %14 : vector<2x128xf32>
    %52 = math.exp %51 : vector<2x128xf32>
    %53 = arith.addf %34, %52 : vector<2x128xf32>
    %54 = arith.mulf %52, %51 : vector<2x128xf32>
    %55 = arith.addf %36, %54 : vector<2x128xf32>
    %c2_i32 = arith.constant 2 : i32
    %56 = vector.broadcast %c2_i32 : i32 to vector<2x128xi32>
    %57 = arith.cmpi eq, %3, %56 : vector<2x128xi32>
    %c2 = arith.constant 2 : index
    %58 = memref.load %arg2[%c2] : memref<4xf32, #tpu.memory_space<smem>>
    %59 = vector.broadcast %58 : f32 to vector<2x128xf32>
    %60 = arith.mulf %51, %59 : vector<2x128xf32>
    %cst_10 = arith.constant 0.000000e+00 : f32
    %61 = vector.broadcast %cst_10 : f32 to vector<2x128xf32>
    %62 = arith.select %57, %60, %61 : vector<2x128xi1>, vector<2x128xf32>
    %cst_11 = arith.constant 0.000000e+00 : f32
    %63 = vector.broadcast %58 : f32 to vector<2x128xf32>
    %64 = vector.broadcast %cst_11 : f32 to vector<2x128xf32>
    %65 = arith.select %57, %63, %64 : vector<2x128xi1>, vector<2x128xf32>
    %66 = arith.addf %47, %65 : vector<2x128xf32>
    %67 = arith.addf %48, %62 : vector<2x128xf32>
    %68 = vector.extract_strided_slice %1 {offsets = [3, 0, 0], sizes = [1, 2, 128], strides = [1, 1, 1]} : vector<4x2x128xf32> to vector<1x2x128xf32>
    %69 = vector.shape_cast %68 : vector<1x2x128xf32> to vector<2x128xf32>
    %70 = arith.subf %69, %14 : vector<2x128xf32>
    %71 = math.exp %70 : vector<2x128xf32>
    %72 = arith.addf %53, %71 : vector<2x128xf32>
    %73 = arith.mulf %71, %70 : vector<2x128xf32>
    %74 = arith.addf %55, %73 : vector<2x128xf32>
    %c3_i32 = arith.constant 3 : i32
    %75 = vector.broadcast %c3_i32 : i32 to vector<2x128xi32>
    %76 = arith.cmpi eq, %3, %75 : vector<2x128xi32>
    %c3 = arith.constant 3 : index
    %77 = memref.load %arg2[%c3] : memref<4xf32, #tpu.memory_space<smem>>
    %78 = vector.broadcast %77 : f32 to vector<2x128xf32>
    %79 = arith.mulf %70, %78 : vector<2x128xf32>
    %cst_12 = arith.constant 0.000000e+00 : f32
    %80 = vector.broadcast %cst_12 : f32 to vector<2x128xf32>
    %81 = arith.select %76, %79, %80 : vector<2x128xi1>, vector<2x128xf32>
    %cst_13 = arith.constant 0.000000e+00 : f32
    %82 = vector.broadcast %77 : f32 to vector<2x128xf32>
    %83 = vector.broadcast %cst_13 : f32 to vector<2x128xf32>
    %84 = arith.select %76, %82, %83 : vector<2x128xi1>, vector<2x128xf32>
    %85 = arith.addf %66, %84 : vector<2x128xf32>
    %86 = arith.addf %67, %81 : vector<2x128xf32>
    %87 = math.log %72 : vector<2x128xf32>
    %88 = tpu.reciprocal %72 {approx = true} : vector<2x128xf32> -> vector<2x128xf32>
    %cst_14 = arith.constant 0.000000e+00 : f32
    %89 = vector.broadcast %cst_14 : f32 to vector<2x128xf32>
    %90 = arith.subf %89, %74 : vector<2x128xf32>
    %91 = arith.mulf %90, %88 : vector<2x128xf32>
    %92 = arith.addf %91, %87 : vector<2x128xf32>
    %93 = arith.mulf %85, %87 : vector<2x128xf32>
    %94 = arith.addf %92, %93 : vector<2x128xf32>
    %95 = arith.subf %94, %86 : vector<2x128xf32>
    %c0_15 = arith.constant 0 : index
    %c0_16 = arith.constant 0 : index
    %c0_17 = arith.constant 0 : index
    %96 = vector.load %arg5[%c0_15, %c0_16, %c0_17] : memref<1x2x128xf32, #tpu.memory_space<vmem>>, vector<1x2x128xf32>
    %97 = vector.shape_cast %96 : vector<1x2x128xf32> to vector<2x128xf32>
    %98 = vector.shape_cast %95 : vector<2x128xf32> to vector<1x2x128xf32>
    tpu.vector_store %arg5[%c0_15, %c0_16, %c0_17], %98 {strides = array<i32>} : memref<1x2x128xf32, #tpu.memory_space<vmem>>, vector<1x2x128xf32>,
    return
  }
  func.func @transform_0(%arg0: i32, %arg1: i32) -> i32 {
    %c0_i32 = arith.constant 0 : i32
    %c0_i32_0 = arith.constant 0 : i32
    return %c0_i32 : i32
  }
  func.func @transform_1(%arg0: i32, %arg1: i32) -> (i32, i32, i32, i32) {
    %c0_i32 = arith.constant 0 : i32
    %c0_i32_0 = arith.constant 0 : i32
    %c0_i32_1 = arith.constant 0 : i32
    return %arg0, %c0_i32, %arg1, %c0_i32_0 : i32, i32, i32, i32
  }
  func.func @transform_2(%arg0: i32, %arg1: i32) -> (i32, i32, i32) {
    %c0_i32 = arith.constant 0 : i32
    %c0_i32_0 = arith.constant 0 : i32
    return %arg0, %arg1, %c0_i32 : i32, i32, i32
  }
  func.func @transform_3(%arg0: i32, %arg1: i32) -> (i32, i32, i32) {
    %c0_i32 = arith.constant 0 : i32
    %c0_i32_0 = arith.constant 0 : i32
    return %arg0, %arg1, %c0_i32 : i32, i32, i32
  }
}

</mosaic_0001>

<llo_original>
// kernel: tpu_custom_call.1
$region0: #{tpu_custom_call.1}
  #allocation0 [shape = 'u32[]', space=smem, size = 0x4, offset = 0x4, fixed_abs, tag = 'smem constant byte address 0x4 - core index']
  #allocation1 [shape = 'u32[72,128]{1,0:T(1,128)}', space=vmem, size = 0x9000, scoped, tag = 'internal scratch']
  %s0 = inlined_call_operand.hbm [shape: f32[4], index: 0, kind: input, shape index: {}]
  %s1 = inlined_call_operand.hbm [shape: f32[2,4,2,128], index: 1, kind: input, shape index: {}]
  %s2 = inlined_call_operand.hbm [shape: s32[2,2,128], index: 2, kind: input, shape index: {}]
  %s3 = inlined_call_operand.hbm [shape: f32[2,2,128], index: 3, kind: output, shape index: {}]
  %s4 = sld [smem:[#allocation0]]
  $region57: #{tpu_custom_call.1} parent=0
    _
  %s6 = ssub.s32 1, %s4
  %s7 = scalar_select 0, %s6, %s4
  $region1: #{tpu_custom_call.1} parent=0
    #allocation2 [shape = 'u8[512]{0}', space=smem, size = 0x200, scoped, tag = 'input window, operand 0, single buffered']
    #allocation3 [shape = 's32[2]{0}', space=sflag, size = 0x8, scoped, tag = 'scoped memory for tpu_custom_call.1']
    #allocation4 [shape = 's32[2]{0}', space=sflag, size = 0x8, scoped, tag = 'scoped memory for tpu_custom_call.1']
    #allocation5 [shape = 's32[2]{0}', space=sflag, size = 0x8, scoped, tag = 'scoped memory for tpu_custom_call.1']
    #allocation6 [shape = 'u8[8192]{0}', space=vmem, size = 0x2000, scoped, tag = 'input window, operand 1']
    #allocation7 [shape = 'u8[2048]{0}', space=vmem, size = 0x800, scoped, tag = 'input window, operand 2']
    #allocation8 [shape = 's32[2]{0}', space=sflag, size = 0x8, scoped, tag = 'scoped memory for tpu_custom_call.1']
    #allocation9 [shape = 'u8[2048]{0}', space=vmem, size = 0x800, scoped, tag = 'output window, operand 0']
    %8 = vsyncpa [#allocation5], 0
    %9 = vsyncpa [#allocation3], 0
    %s10 = scalar_lea.sflag [#allocation3], 1
    %11 = vsyncpa %s10, 0
    %12 = vsyncpa [#allocation8], 0
    %s13 = scalar_lea.sflag [#allocation8], 1
    %14 = vsyncpa %s13, 0
    %15 = vsyncpa [#allocation4], 0
    %s16 = scalar_lea.sflag [#allocation4], 1
    %17 = vsyncpa %s16, 0
    loop: start=0, step=1, limit=4
    $region2: #{tpu_custom_call.1} parent=1 // loop_pre_header
      _
    $region3: #{tpu_custom_call.1} parent=1 // loop_header
      %s19 = sphi 0, %s23
      %p20 = scmp.ge.s32.totalorder %s19, 4
      %s26 = sphi 0, %s38
      %s27 = sphi 0, %s34
      %s28 = sphi 0, %s26
      %s29 = sphi 0, %s27
      %s30 = sphi 0, %s28
      %s31 = sphi 0, %s29
      %s39 = sphi 0, %s39
      %s41 = sphi 0, %s39
      %s42 = sphi 0, %s41
      %s56 = sphi 0, %s42
      %s64 = sphi 0, %s66
      %s67 = sphi 0, %s64
      %s68 = sphi 0, %s67
      %s84 = sphi 0, %s68
      %s92 = sphi 0, %s94
      %s95 = sphi 0, %s92
      %s96 = sphi 0, %s95
      %s112 = sphi 0, %s96
      %s120 = sphi 0, %s122
      %s123 = sphi 0, %s120
      %s124 = sphi 0, %s123
      %s140 = sphi 0, %s124
    $region4: #{tpu_custom_call.1} parent=1 // loop_header_branch
      %22 = sbr.rel (%p20) target = $region8
    $region5: #{tpu_custom_call.1} parent=1 // loop_body
      %s24 = ssub.s32 %s19, 1
      %s25 = ssub.s32 %s19, 2
      %s32 = sadd.s32 1, %s27
      %p33 = scmp.ge.s32.totalorder %s32, 1
      %s34 = scalar_select %p33, 0, %s32
      %s35 = sadd.s32 1, %s26
      %s36 = scalar_select %p33, %s35, %s26
      %p37 = scmp.ge.s32.totalorder %s36, 2
      %s38 = scalar_select %p37, 0, %s36
      %s40 = sadd.s32 %s39, 1
      %p43 = scmp.eq.s32.totalorder %s19, 1
      %p44 = scmp.ne.s32.totalorder %s39, %s41
      %p45 = scmp.eq.s32.totalorder %s19, 0
      %p46 = por %p44, %p45
      %p47 = scmp.ne.s32.totalorder %s39, %s41
      %p48 = scmp.eq.s32.totalorder %s24, 1
      %p49 = por %p47, %p48
      %p50 = scmp.ne.s32.totalorder %s41, %s42
      %p51 = scmp.eq.s32.totalorder %s24, 0
      %p52 = por %p50, %p51
      %p53 = scmp.ne.s32.totalorder %s41, %s42
      %p54 = scmp.eq.s32.totalorder %s25, 1
      %p55 = por %p53, %p54
      %p57 = scmp.ne.s32.totalorder %s42, %s56
      %p58 = scmp.eq.s32.totalorder %s25, 0
      %p59 = por %p57, %p58
      %s60 = ssub.s32 %s26, %s38
      %s61 = ssub.s32 %s27, %s34
      %s62 = sor.u32 %s60, %s61
      %p63 = scmp.eq.s32.totalorder %s62, 0
      %s65 = sadd.s32 %s64, 1
      %s66 = scalar_select %p63, %s64, %s65
      %p69 = pneg %p63
      %p70 = scmp.eq.s32.totalorder %s19, 1
      %p71 = por %p69, %p70
      %p72 = scmp.ne.s32.totalorder %s64, %s67
      %p73 = scmp.eq.s32.totalorder %s19, 0
      %p74 = por %p72, %p73
      %p75 = scmp.ne.s32.totalorder %s64, %s67
      %p76 = scmp.eq.s32.totalorder %s24, 1
      %p77 = por %p75, %p76
      %p78 = scmp.ne.s32.totalorder %s67, %s68
      %p79 = scmp.eq.s32.totalorder %s24, 0
      %p80 = por %p78, %p79
      %p81 = scmp.ne.s32.totalorder %s67, %s68
      %p82 = scmp.eq.s32.totalorder %s25, 1
      %p83 = por %p81, %p82
      %p85 = scmp.ne.s32.totalorder %s68, %s84
      %p86 = scmp.eq.s32.totalorder %s25, 0
      %p87 = por %p85, %p86
      %s88 = ssub.s32 %s26, %s38
      %s89 = ssub.s32 %s27, %s34
      %s90 = sor.u32 %s88, %s89
      %p91 = scmp.eq.s32.totalorder %s90, 0
      %s93 = sadd.s32 %s92, 1
      %s94 = scalar_select %p91, %s92, %s93
      %p97 = pneg %p91
      %p98 = scmp.eq.s32.totalorder %s19, 1
      %p99 = por %p97, %p98
      %p100 = scmp.ne.s32.totalorder %s92, %s95
      %p101 = scmp.eq.s32.totalorder %s19, 0
      %p102 = por %p100, %p101
      %p103 = scmp.ne.s32.totalorder %s92, %s95
      %p104 = scmp.eq.s32.totalorder %s24, 1
      %p105 = por %p103, %p104
      %p106 = scmp.ne.s32.totalorder %s95, %s96
      %p107 = scmp.eq.s32.totalorder %s24, 0
      %p108 = por %p106, %p107
      %p109 = scmp.ne.s32.totalorder %s95, %s96
      %p110 = scmp.eq.s32.totalorder %s25, 1
      %p111 = por %p109, %p110
      %p113 = scmp.ne.s32.totalorder %s96, %s112
      %p114 = scmp.eq.s32.totalorder %s25, 0
      %p115 = por %p113, %p114
      %s116 = ssub.s32 %s26, %s38
      %s117 = ssub.s32 %s27, %s34
      %s118 = sor.u32 %s116, %s117
      %p119 = scmp.eq.s32.totalorder %s118, 0
      %s121 = sadd.s32 %s120, 1
      %s122 = scalar_select %p119, %s120, %s121
      %p125 = pneg %p119
      %p126 = scmp.eq.s32.totalorder %s19, 1
      %p127 = por %p125, %p126
      %p128 = scmp.ne.s32.totalorder %s120, %s123
      %p129 = scmp.eq.s32.totalorder %s19, 0
      %p130 = por %p128, %p129
      %p131 = scmp.ne.s32.totalorder %s120, %s123
      %p132 = scmp.eq.s32.totalorder %s24, 1
      %p133 = por %p131, %p132
      %p134 = scmp.ne.s32.totalorder %s123, %s124
      %p135 = scmp.eq.s32.totalorder %s24, 0
      %p136 = por %p134, %p135
      %p137 = scmp.ne.s32.totalorder %s123, %s124
      %p138 = scmp.eq.s32.totalorder %s25, 1
      %p139 = por %p137, %p138
      %p141 = scmp.ne.s32.totalorder %s124, %s140
      %p142 = scmp.eq.s32.totalorder %s25, 0
      %p143 = por %p141, %p142
      %p144 = scmp.le.s32.totalorder 1, %s19
      %p145 = scmp.lt.s32.totalorder %s19, 3
      %p146 = pnand %p144, %p145
      %p147 = pneg %p146
      // Predicated region
      $region9: #{tpu_custom_call.1} parent=5 // pred_check
        _
      $region10: #{tpu_custom_call.1} parent=5 // pred_check_branch
        %149 = sbr.rel (%p146) target = $region12
      $region11: #{tpu_custom_call.1} parent=5 // pred_region
        %s150 = ssub.s32 %s19, 1
        // Predicated region
        $region13: #{tpu_custom_call.1} parent=11 // pred_check
          %p151 = pneg %p52
        $region14: #{tpu_custom_call.1} parent=11 // pred_check_branch
          %153 = sbr.rel (%p151) target = $region16
        $region15: #{tpu_custom_call.1} parent=11 // pred_region
          %155 = vsyncadd [#allocation5], 0
          %s157 = sshll.u32 %s0, 4
          %s158 = int_to_ptr.hbm [resolvable:$true] %s157
          %160 = dma.hbm_to_smem %s158, 16, [#allocation2], [#allocation5]
        $region16: #{tpu_custom_call.1} parent=11 // pred_fallthru
          _
      $region12: #{tpu_custom_call.1} parent=5 // pred_fallthru
        _
      %p161 = scmp.lt.s32.totalorder %s19, 2
      // Predicated region
      $region17: #{tpu_custom_call.1} parent=5 // pred_check
        %p162 = pneg %p161
      $region18: #{tpu_custom_call.1} parent=5 // pred_check_branch
        %164 = sbr.rel (%p162) target = $region20
      $region19: #{tpu_custom_call.1} parent=5 // pred_region
        // Predicated region
        $region21: #{tpu_custom_call.1} parent=19 // pred_check
          %p165 = pneg %p74
        $region22: #{tpu_custom_call.1} parent=19 // pred_check_branch
          %167 = sbr.rel (%p165) target = $region24
        $region23: #{tpu_custom_call.1} parent=19 // pred_region
          %s168 = sand.u32 %s64, 1
          %s169 = scalar_lea.sflag [#allocation3], %s168
          %s170 = sand.u32 %s64, 1
          %s171 = smul.addr %s170, 8
          %s172 = scalar_lea.vmem [#allocation6], %s171
          %174 = vsyncadd %s169, 0
          %s175 = smul.addr %s26, 4
          %s176 = sadd.s32 %s27, %s175
          %s177 = smul.addr %s176, 2
          %s178 = scalar_lea.hbm %s1, %s177
          %s179 = sshll.u32 %s178, 4
          %s180 = int_to_ptr.hbm [resolvable:$true] %s179
          %s181 = sshll.u32 %s172, 4
          %s182 = int_to_ptr.vmem [resolvable:$true] %s181
          %187 = dma.hbm_to_vmem [thread:$0]  %s180, 128, %s182, %s169, 32, 32, 2
        $region24: #{tpu_custom_call.1} parent=19 // pred_fallthru
          _
        // Predicated region
        $region25: #{tpu_custom_call.1} parent=19 // pred_check
          %p188 = pneg %p102
        $region26: #{tpu_custom_call.1} parent=19 // pred_check_branch
          %190 = sbr.rel (%p188) target = $region28
        $region27: #{tpu_custom_call.1} parent=19 // pred_region
          %s191 = sand.u32 %s92, 1
          %s192 = scalar_lea.sflag [#allocation8], %s191
          %s193 = sand.u32 %s92, 1
          %s194 = smul.addr %s193, 2
          %s195 = scalar_lea.vmem [#allocation7], %s194
          %197 = vsyncadd %s192, 0
          %s198 = sadd.s32 %s27, %s26
          %s199 = smul.addr %s198, 2
          %s200 = scalar_lea.hbm %s2, %s199
          %s202 = sshll.u32 %s200, 4
          %s203 = int_to_ptr.hbm [resolvable:$true] %s202
          %s204 = sshll.u32 %s195, 4
          %s205 = int_to_ptr.vmem [resolvable:$true] %s204
          %207 = dma.hbm_to_vmem [thread:$0]  %s203, 32, %s205, %s192
        $region28: #{tpu_custom_call.1} parent=19 // pred_fallthru
          _
      $region20: #{tpu_custom_call.1} parent=5 // pred_fallthru
        _
      %p208 = scmp.le.s32.totalorder 1, %s19
      %p209 = scmp.lt.s32.totalorder %s19, 3
      %p210 = pnand %p208, %p209
      %p211 = pneg %p210
      // Predicated region
      $region29: #{tpu_custom_call.1} parent=5 // pred_check
        _
      $region30: #{tpu_custom_call.1} parent=5 // pred_check_branch
        %213 = sbr.rel (%p210) target = $region32
      $region31: #{tpu_custom_call.1} parent=5 // pred_region
        %s214 = ssub.s32 %s19, 1
        // Predicated region
        $region33: #{tpu_custom_call.1} parent=31 // pred_check
          %p215 = pneg %p52
        $region34: #{tpu_custom_call.1} parent=31 // pred_check_branch
          %217 = sbr.rel (%p215) target = $region36
        $region35: #{tpu_custom_call.1} parent=31 // pred_region
          %219 = dma.done [#allocation5], 16
        $region36: #{tpu_custom_call.1} parent=31 // pred_fallthru
          _
        %s220 = sand.u32 %s67, 1
        %s221 = scalar_lea.sflag [#allocation3], %s220
        %s222 = sand.u32 %s67, 1
        %s223 = smul.addr %s222, 8
        %s224 = scalar_lea.vmem [#allocation6], %s223
        // Predicated region
        $region37: #{tpu_custom_call.1} parent=31 // pred_check
          %p225 = pneg %p80
        $region38: #{tpu_custom_call.1} parent=31 // pred_check_branch
          %227 = sbr.rel (%p225) target = $region40
        $region39: #{tpu_custom_call.1} parent=31 // pred_region
          %229 = dma.done %s221, 128
        $region40: #{tpu_custom_call.1} parent=31 // pred_fallthru
          _
        %s230 = sand.u32 %s95, 1
        %s231 = scalar_lea.sflag [#allocation8], %s230
        %s232 = sand.u32 %s95, 1
        %s233 = smul.addr %s232, 2
        %s234 = scalar_lea.vmem [#allocation7], %s233
        // Predicated region
        $region41: #{tpu_custom_call.1} parent=31 // pred_check
          %p235 = pneg %p108
        $region42: #{tpu_custom_call.1} parent=31 // pred_check_branch
          %237 = sbr.rel (%p235) target = $region44
        $region43: #{tpu_custom_call.1} parent=31 // pred_region
          %239 = dma.done %s231, 32
        $region44: #{tpu_custom_call.1} parent=31 // pred_fallthru
          _
        %240 = sfence
        %p241 = pneg %p52
        %p242 = pneg %p49
        %s243 = sand.u32 %s67, 1
        %s244 = scalar_lea.sflag [#allocation3], %s243
        %s245 = sand.u32 %s67, 1
        %s246 = smul.addr %s245, 8
        %s247 = scalar_lea.vmem [#allocation6], %s246
        %p248 = pneg %p80
        %p249 = pneg %p77
        %s250 = sand.u32 %s95, 1
        %s251 = scalar_lea.sflag [#allocation8], %s250
        %s252 = sand.u32 %s95, 1
        %s253 = smul.addr %s252, 2
        %s254 = scalar_lea.vmem [#allocation7], %s253
        %p255 = pneg %p108
        %p256 = pneg %p105
        %p257 = pneg %p136
        %p258 = pneg %p133
        %s259 = sand.u32 %s123, 1
        %s260 = scalar_lea.sflag [#allocation4], %s259
        %s261 = sand.u32 %s123, 1
        %s262 = smul.addr %s261, 2
        %s263 = scalar_lea.vmem [#allocation9], %s262
        %v264 = vld [vmem:[%s224] sm:$0x3]
        %v265 = vld [vmem:[%s224 + $0x2] sm:$0x3]
        %v266 = vld [vmem:[%s224 + $0x4] sm:$0x3]
        %v267 = vld [vmem:[%s224 + $0x6] sm:$0x3]
        %v268 = vld [vmem:[%s234] sm:$0x3]
        %v269 = vmax.f32 %v264, %v265
        %v270 = vmax.f32 %v269, %v266
        %v271 = vmax.f32 %v270, %v267
        %v272 = vsub.f32 %v264, %v271
        %v273 = vmul.f32 %v272, 1.442695
        %v274 = vpow.pop %v273
        %v275 = vmul.f32 %v274, %v272
        %vm276 = vcmp.eq.s32.totalorder %v268, 0
        %s277 = sld [smem:[#allocation2]]
        %v278 = vstv %s277
        %v279 = vmul.f32 %v272, %v278
        %v280 = vsel %vm276, %v279, 0.0
        %v281 = vsel %vm276, %v278, 0.0
        %v282 = vsub.f32 %v265, %v271
        %v283 = vmul.f32 %v282, 1.442695
        %v284 = vpow.pop %v283
        %v285 = vadd.f32 %v274, %v284
        %v286 = vmul.f32 %v284, %v282
        %v287 = vadd.f32 %v275, %v286
        %vm288 = vcmp.eq.s32.totalorder %v268, 1
        %s289 = sld [smem:[#allocation2 + $0x1]]
        %v290 = vstv %s289
        %v291 = vmul.f32 %v282, %v290
        %v292 = vsel %vm288, %v291, 0.0
        %v293 = vsel %vm288, %v290, 0.0
        %v294 = vadd.f32 %v281, %v293
        %v295 = vadd.f32 %v280, %v292
        %v296 = vsub.f32 %v266, %v271
        %v297 = vmul.f32 %v296, 1.442695
        %v298 = vpow.pop %v297
        %v299 = vadd.f32 %v285, %v298
        %v300 = vmul.f32 %v298, %v296
        %v301 = vadd.f32 %v287, %v300
        %vm302 = vcmp.eq.s32.totalorder %v268, 2
        %s303 = sld [smem:[#allocation2 + $0x2]]
        %v304 = vstv %s303
        %v305 = vmul.f32 %v296, %v304
        %v306 = vsel %vm302, %v305, 0.0
        %v307 = vsel %vm302, %v304, 0.0
        %v308 = vadd.f32 %v294, %v307
        %v309 = vadd.f32 %v295, %v306
        %v310 = vsub.f32 %v267, %v271
        %v311 = vmul.f32 %v310, 1.442695
        %v312 = vpow.pop %v311
        %v313 = vadd.f32 %v299, %v312
        %v314 = vmul.f32 %v312, %v310
        %v315 = vadd.f32 %v301, %v314
        %vm316 = vcmp.eq.s32.totalorder %v268, 3
        %s317 = sld [smem:[#allocation2 + $0x3]]
        %v318 = vstv %s317
        %v319 = vmul.f32 %v310, %v318
        %v320 = vsel %vm316, %v319, 0.0
        %v321 = vsel %vm316, %v318, 0.0
        %v322 = vadd.f32 %v308, %v321
        %v323 = vadd.f32 %v309, %v320
        %v324 = vlog2.pop %v313
        %v325 = vmul.f32 %v324, 0.6931472
        %v326 = vrcp.pop %v313
        %v327 = vsub.f32 0.0, %v315
        %v328 = vmul.f32 %v327, %v326
        %v329 = vadd.f32 %v328, %v325
        %v330 = vmul.f32 %v322, %v325
        %v331 = vadd.f32 %v329, %v330
        %v332 = vsub.f32 %v331, %v323
        %333 = vst [vmem:[%s263] sm:$0x3] %v332
        %s334 = sand.u32 %s123, 1
        %s335 = scalar_lea.sflag [#allocation4], %s334
        %s336 = sand.u32 %s123, 1
        %s337 = smul.addr %s336, 2
        %s338 = scalar_lea.vmem [#allocation9], %s337
        // Predicated region
        $region45: #{tpu_custom_call.1} parent=31 // pred_check
          %p339 = pneg %p133
        $region46: #{tpu_custom_call.1} parent=31 // pred_check_branch
          %341 = sbr.rel (%p339) target = $region48
        $region47: #{tpu_custom_call.1} parent=31 // pred_region
          %343 = vsyncadd %s335, 0
          %s344 = sadd.s32 %s29, %s28
          %s345 = smul.addr %s344, 2
          %s346 = scalar_lea.hbm %s3, %s345
          %s348 = sshll.u32 %s338, 4
          %s349 = int_to_ptr.vmem [resolvable:$true] %s348
          %s350 = sshll.u32 %s346, 4
          %s351 = int_to_ptr.hbm [resolvable:$true] %s350
          %353 = dma.vmem_to_hbm [thread:$0]  %s349, 32, %s351, %s335
        $region48: #{tpu_custom_call.1} parent=31 // pred_fallthru
          _
      $region32: #{tpu_custom_call.1} parent=5 // pred_fallthru
        _
      %p354 = scmp.le.s32.totalorder 2, %s19
      // Predicated region
      $region49: #{tpu_custom_call.1} parent=5 // pred_check
        %p355 = pneg %p354
      $region50: #{tpu_custom_call.1} parent=5 // pred_check_branch
        %357 = sbr.rel (%p355) target = $region52
      $region51: #{tpu_custom_call.1} parent=5 // pred_region
        %s358 = ssub.s32 %s19, 2
        // Predicated region
        $region53: #{tpu_custom_call.1} parent=51 // pred_check
          %p359 = pneg %p139
        $region54: #{tpu_custom_call.1} parent=51 // pred_check_branch
          %361 = sbr.rel (%p359) target = $region56
        $region55: #{tpu_custom_call.1} parent=51 // pred_region
          %s362 = sand.u32 %s124, 1
          %s363 = scalar_lea.sflag [#allocation4], %s362
          %s364 = sand.u32 %s124, 1
          %s365 = smul.addr %s364, 2
          %s366 = scalar_lea.vmem [#allocation9], %s365
          %368 = dma.done %s363, 32
        $region56: #{tpu_custom_call.1} parent=51 // pred_fallthru
          _
      $region52: #{tpu_custom_call.1} parent=5 // pred_fallthru
        _
    $region6: #{tpu_custom_call.1} parent=1 // loop_footer
      %s23 = sadd.s32 1, %s19
    $region7: #{tpu_custom_call.1} parent=1 // loop_footer_branch
      %18 = sbr.rel target = $region3
    $region8: #{tpu_custom_call.1} parent=1 // loop_exit
      _
    %369 = vsyncpa [#allocation3], 1
    %s370 = scalar_lea.sflag [#allocation3], 1
    %371 = vsyncpa %s370, 1
    %372 = vsyncpa [#allocation8], 1
    %s373 = scalar_lea.sflag [#allocation8], 1
    %374 = vsyncpa %s373, 1
    %375 = vsyncpa [#allocation4], 1
    %s376 = scalar_lea.sflag [#allocation4], 1
    %377 = vsyncpa %s376, 1
    %378 = vsyncpa [#allocation5], 1
    %s379 = scalar_lea.sflag [#allocation5], 1
    %380 = vsyncpa %s379, 1

</llo_original>
